<compile_context>
chip_gen: v7x
topology: tpu7x:2x2x1
jax: 0.10.0
libtpu: 0.0.40
codegen_flags: <defaults>
</compile_context>

<pallas_src>
import numpy as np
import jax
import jax.numpy as jnp
from jax.experimental import pallas as pl
from jax.experimental.pallas import tpu as pltpu
from scipy.optimize import linear_sum_assignment

# Matcher hyper-parameters (module __init__ defaults).
COST_CLASS = 1.0
COST_BBOX = 1.0
COST_GIOU = 1.0  # unused by the reference forward (giou never computed there)
RATIO = 0.5
MAX_PADDING = 10

# cost_bbox is folded into the coordinates outside the kernel, so the
# inside-sphere test compares the *scaled* L1 distance against cost_bbox*ratio.
# (Equivalent only for cost_bbox > 0; default is 1.0.)
_RATIO_SCALED = float(RATIO * COST_BBOX)

_LANE_CHUNK = 128  # per-iteration lane width inside the kernel (one vreg wide)


def _round_up(x, m):
    return ((x + m - 1) // m) * m


def _cost_kernel(logits_ref, onehot_ref, tc_ref, pcT_ref, cost_ref, inside_ref):
    """Transposed cost tile for a (B_blk, Q_blk) block of the batch/query space.

    logits_ref : (Bb, C, Qb)   f32   logits pre-transposed, queries lane-dense
    onehot_ref : (Bb, T8, C)   f32   -cost_class * one_hot(labels)
    tc_ref     : (Bb, T32, D)  f32   target centers, pre-scaled by cost_bbox
    pcT_ref    : (Bb, D, Qb)   f32   pred centers transposed, pre-scaled
    cost_ref   : (Bb, T8, Qb)  f32   cost_bbox*cdist + cost_class*(-prob gather)
    inside_ref : (Bb, T32, Qb) int8  (cdist < ratio)
    """
    Bb, C, Qb = logits_ref.shape
    T8 = onehot_ref.shape[1]
    D = tc_ref.shape[2]

    # Query-invariant, tiny: loaded once per grid step.
    neg_onehot = onehot_ref[...]                       # (Bb, T8, C)
    tc = tc_ref[...]                                   # (Bb, T32, D)

    # Static sub-chunk loop over the lane (query) axis keeps prob / cost_class
    # / cdist small enough to live in vregs, fusing the whole
    # softmax -> gather -> cdist -> store pipeline per chunk.
    for q0 in range(0, Qb, _LANE_CHUNK):
        q1 = q0 + _LANE_CHUNK

        # Exact softmax over classes (C on sublanes, f32 throughout — v5e-safe,
        # and exact so near-tie Hungarian assignments are not perturbed).
        logits = logits_ref[:, :, q0:q1]               # (Bb, C, Qc)
        m = jnp.max(logits, axis=1, keepdims=True)
        e = jnp.exp(logits - m)
        prob = e / jnp.sum(e, axis=1, keepdims=True)   # (Bb, C, Qc)

        # -cost_class * prob[:, labels] via one-hot matmul on the MXU; the
        # class weight is already folded into neg_onehot.
        cost_cls = jnp.einsum("btc,bcq->btq", neg_onehot, prob,
                              preferred_element_type=jnp.float32)  # (Bb, T8, Qc)

        # L1 cdist, transposed: targets on sublanes, queries on lanes.
        pcT = pcT_ref[:, :, q0:q1]                     # (Bb, D, Qc)
        cdist = jnp.abs(tc[:, :, 0:1] - pcT[:, 0:1, :])
        for d in range(1, D):
            cdist = cdist + jnp.abs(tc[:, :, d:d + 1] - pcT[:, d:d + 1, :])

        inside_ref[:, :, q0:q1] = (cdist < _RATIO_SCALED).astype(jnp.int8)
        cost_ref[:, :, q0:q1] = cdist[:, :T8, :] + cost_cls


def _choose_tiling(bs, Q, T, C, D):
    """Static (python-int) tile selection, VMEM-budget and megacore aware."""
    T8 = max(_round_up(T, 8), 8)          # f32 cost rows   (sublane multiple)
    T32 = max(_round_up(T, 32), 32)       # int8 inside rows (int8 sublane tile)
    Q_pad = max(_round_up(Q, 128), 128)   # queries lane-dense

    q_options = [q for q in (512, 256, 128) if Q_pad % q == 0]
    b_divisors = [d for d in range(min(bs, 4), 0, -1) if bs % d == 0]
    Q_blk = q_options[0]
    B_blk = b_divisors[0]

    def vmem_bytes(bb, qb):
        # double-buffered pipeline IO + per-128-lane-chunk intermediates
        io = bb * (C * qb * 4 + T8 * C * 4 + T32 * D * 4 + D * qb * 4
                   + T8 * qb * 4 + T32 * qb * 1)
        inter = bb * _LANE_CHUNK * (2 * C + T32 + 2 * T8) * 4
        return 2 * io + inter

    budget = 16 << 20  # headroom under v7x's 32 MiB default scoped VMEM
    bi = qi = 0
    while vmem_bytes(B_blk, Q_blk) > budget:
        if bi + 1 < len(b_divisors):
            bi += 1
            B_blk = b_divisors[bi]
        elif qi + 1 < len(q_options):
            qi += 1
            Q_blk = q_options[qi]
        else:
            break
    B_pad = _round_up(bs, B_blk)

    # v7x has 2 TensorCores: make sure the parallel grid has >= 2 steps.
    if (B_pad // B_blk) * (Q_pad // Q_blk) < 2:
        if bs > 1:
            B_blk = max(d for d in b_divisors if d <= max(1, bs // 2))
            B_pad = _round_up(bs, B_blk)
        elif qi + 1 < len(q_options):
            Q_blk = q_options[qi + 1]

    return B_blk, B_pad, Q_blk, Q_pad, T8, T32


@jax.jit
def _matcher_cost_device(labels, logits, pred_center, tgt_center):
    """Device-side prep + pallas_call + crop, all under one jit."""
    bs, Q, C = logits.shape
    T = labels.shape[1]
    D = pred_center.shape[-1]
    B_blk, B_pad, Q_blk, Q_pad, T8, T32 = _choose_tiling(bs, Q, T, C, D)

    # On-device prep (fused XLA prologue): transposes so queries are lane-dense,
    # one-hot pre-scaled by -cost_class, coords pre-scaled by cost_bbox.
    logitsT = jnp.pad(jnp.transpose(logits, (0, 2, 1)),
                      ((0, B_pad - bs), (0, 0), (0, Q_pad - Q)))
    onehot = jnp.pad((-COST_CLASS) * jax.nn.one_hot(labels, C, dtype=jnp.float32),
                     ((0, B_pad - bs), (0, T8 - T), (0, 0)))
    tc = jnp.pad(COST_BBOX * tgt_center,
                 ((0, B_pad - bs), (0, T32 - T), (0, 0)))
    pcT = jnp.pad(jnp.transpose(COST_BBOX * pred_center, (0, 2, 1)),
                  ((0, B_pad - bs), (0, 0), (0, Q_pad - Q)))

    grid = (B_pad // B_blk, Q_pad // Q_blk)
    cost_full, inside_full = pl.pallas_call(
        _cost_kernel,
        out_shape=(jax.ShapeDtypeStruct((B_pad, T8, Q_pad), jnp.float32),
                   jax.ShapeDtypeStruct((B_pad, T32, Q_pad), jnp.int8)),
        grid_spec=pltpu.PrefetchScalarGridSpec(
            num_scalar_prefetch=0,
            grid=grid,
            in_specs=[
                pl.BlockSpec((B_blk, C, Q_blk), lambda bi, qi: (bi, 0, qi)),
                pl.BlockSpec((B_blk, T8, C), lambda bi, qi: (bi, 0, 0)),
                pl.BlockSpec((B_blk, T32, D), lambda bi, qi: (bi, 0, 0)),
                pl.BlockSpec((B_blk, D, Q_blk), lambda bi, qi: (bi, 0, qi)),
            ],
            out_specs=[
                pl.BlockSpec((B_blk, T8, Q_blk), lambda bi, qi: (bi, 0, qi)),
                pl.BlockSpec((B_blk, T32, Q_blk), lambda bi, qi: (bi, 0, qi)),
            ],
        ),
        compiler_params=pltpu.CompilerParams(
            dimension_semantics=("parallel", "parallel"),
            vmem_limit_bytes=32 << 20),
    )(logitsT, onehot, tc, pcT)

    # Crop padding on-device (the slack is now tiny: <=8/32 target rows and
    # <128 query lanes) before anything leaves the device.
    return cost_full[:bs, :T, :Q], inside_full[:bs, :T, :Q]


def matcher_cost(labels, logits, pred_center, tgt_center):
    """Returns (cost, inside) as device arrays in TRANSPOSED (bs, T, Q) layout.

    labels      : (bs, T)      int   (zero-padded beyond each sample's n)
    logits      : (bs, Q, C)   f32
    pred_center : (bs, Q, D)   f32
    tgt_center  : (bs, T, D)   f32
    """
    return _matcher_cost_device(
        jnp.asarray(labels, jnp.int32),
        jnp.asarray(logits, jnp.float32),
        jnp.asarray(pred_center, jnp.float32),
        jnp.asarray(tgt_center, jnp.float32))


def hungarian_matcher_modified_forward(preds, targets, seed=0):
    """Replicates HungarianMatcherModified.forward semantics.

    Cost-matrix / inside-sphere compute runs in the Pallas kernel; the
    assignment / dedup / random sub-sampling run host-side.
    """
    logits = jnp.asarray(preds["pred_logits"], jnp.float32)
    coord = jnp.asarray(preds["coord_pos"], jnp.float32)
    bs, Q, _ = logits.shape
    D = coord.shape[-1]
    assert bs == len(targets)

    nums = [int(len(t["labels"])) for t in targets]
    T_max = max(max(nums), 1)
    labels_pad = np.zeros((bs, T_max), np.int32)
    centers_pad = np.zeros((bs, T_max, D), np.float32)
    for b, t in enumerate(targets):
        n = nums[b]
        if n:
            labels_pad[b, :n] = np.asarray(t["labels"], np.int32)
            centers_pad[b, :n] = np.asarray(t["center"], np.float32)

    cost_j, inside_j = matcher_cost(labels_pad, logits, coord, centers_pad)
    cost = np.asarray(jax.block_until_ready(cost_j))                   # (bs, T_max, Q)
    inside = np.asarray(jax.block_until_ready(inside_j)).astype(bool)  # (bs, T_max, Q)

    rng = np.random.RandomState(seed)  # deterministic stand-in for np.random.choice
    indices, punish_mask_list = [], []
    for b in range(bs):
        n = nums[b]
        if n == 0:
            indices.append([])
            punish_mask_list.append([])
            continue
        # kernel emits (T, Q); transpose the small crop back to (Q, n) so the
        # host-side assignment matches the reference exactly.
        c = cost[b, :n, :].T                                           # (Q, n)

        # TODO(synk): linear_sum_assignment (Hungarian) has no clean Pallas/TPU
        # equivalent; kept on host exactly as the reference does (cost.cpu()).
        row, col = linear_sum_assignment(c)
        ind = [np.asarray(row), np.asarray(col)]

        pred_indices, gt_indices = [], []
        punish_mask = np.ones((Q,), dtype=bool)
        for j in range(n):
            inside_sph = inside[b, j, :]                 # bool (Q,) from kernel
            pred_ind = np.nonzero(inside_sph)[0]
            # NOTE: re-initialized every j, matching the reference module
            # (only the last GT's mask is returned per batch element).
            punish_mask = np.ones_like(inside_sph, dtype=bool)
            punish_mask[pred_ind] = False
            if pred_ind.shape[0] > MAX_PADDING:
                choose = rng.choice(pred_ind.shape[0], MAX_PADDING, replace=False)
                pred_ind = pred_ind[choose]
            punish_mask[pred_ind] = True
            pred_indices.append(pred_ind)
            gt_indices.append(np.ones_like(pred_ind) * j)
        pred_indices = np.concatenate(pred_indices)
        gt_indices = np.concatenate(gt_indices)
        ind[0] = np.concatenate([ind[0], pred_indices])
        ind[1] = np.concatenate([ind[1], gt_indices])
        _, inverse_indices = np.unique(ind[0], return_index=True)
        ind[0] = ind[0][inverse_indices]
        ind[1] = ind[1][inverse_indices]
        indices.append(ind)
        punish_mask_list.append(punish_mask)
    return indices, punish_mask_list


def _numpy_reference_cost(labels, logits, pred_center, tgt_center):
    """Pure-numpy reference of the kernel math (original (B, Q, T) layout)."""
    e = np.exp(logits - logits.max(-1, keepdims=True))
    prob = e / e.sum(-1, keepdims=True)                                # (B, Q, C)
    B = logits.shape[0]
    cost_class = np.stack([-prob[b][:, labels[b]] for b in range(B)])  # (B, Q, T)
    diff = np.abs(pred_center[:, :, None, :] - tgt_center[:, None, :, :])
    cdist = diff.sum(-1)                                               # (B, Q, T)
    return COST_BBOX * cdist + COST_CLASS * cost_class, cdist


if __name__ == "__main__":
    key = jax.random.PRNGKey(0)
    bs, Q, C, D, T = 2, 64, 16, 3, 4

    k1, k2, k3, k4 = jax.random.split(key, 4)
    pred_logits = jax.random.normal(k1, (bs, Q, C), jnp.float32)
    coord_pos = jax.random.uniform(k2, (bs, Q, D), jnp.float32)
    tgt_labels = jax.random.randint(k3, (bs, T), 0, C)
    tgt_center = jax.random.uniform(k4, (bs, T, D), jnp.float32)
    # corners are only iterated over in the reference (never used numerically)
    tgt_corners = np.zeros((bs, T, 8, D), np.float32)

    preds = {"pred_logits": pred_logits, "coord_pos": coord_pos}
    targets = [
        {"labels": np.asarray(tgt_labels[b]),
         "center": np.asarray(tgt_center[b]),
         "corners": tgt_corners[b]}
        for b in range(bs)
    ]

    # Run the Pallas kernel (cost-matrix hot path) and verify against numpy.
    cost_j, inside_j = matcher_cost(tgt_labels, pred_logits, coord_pos, tgt_center)
    cost_tq = np.asarray(jax.block_until_ready(cost_j))       # (bs, T, Q)
    inside_tq = np.asarray(jax.block_until_ready(inside_j))   # (bs, T, Q) int8

    cost_ref, cdist_ref = _numpy_reference_cost(
        np.asarray(tgt_labels), np.asarray(pred_logits, np.float32),
        np.asarray(coord_pos, np.float32), np.asarray(tgt_center, np.float32))
    # Softmax is now exact (no approx reciprocal) -> tight tolerance.
    np.testing.assert_allclose(cost_tq.transpose(0, 2, 1), cost_ref,
                               rtol=1e-4, atol=1e-4)
    inside_got = inside_tq.transpose(0, 2, 1).astype(bool)
    inside_exp = cdist_ref < RATIO
    mism = inside_got != inside_exp
    assert (not mism.any()) or np.all(np.abs(cdist_ref[mism] - RATIO) < 1e-5), \
        "inside-sphere mask mismatch away from the threshold boundary"

    # Full forward (kernel + host-side assignment / punish-mask logic).
    indices, punish_mask_list = hungarian_matcher_modified_forward(preds, targets)
    assert len(indices) == bs and len(punish_mask_list) == bs
    for ind, pm in zip(indices, punish_mask_list):
        assert len(ind) == 2 and ind[0].shape == ind[1].shape
        assert pm.shape == (Q,) and pm.dtype == np.bool_

    print("KERNEL_OK")
</pallas_src>

<mosaic_0001>
module attributes {stable_mosaic.version = 11 : i64} {
  func.func @_cost_kernel(%arg0: i32, %arg1: i32, %arg2: memref<1x16x128xf32, #tpu.memory_space<vmem>>, %arg3: memref<1x8x16xf32, #tpu.memory_space<vmem>>, %arg4: memref<1x32x3xf32, #tpu.memory_space<vmem>>, %arg5: memref<1x3x128xf32, #tpu.memory_space<vmem>>, %arg6: memref<1x8x128xf32, #tpu.memory_space<vmem>>, %arg7: memref<1x32x128xi8, #tpu.memory_space<vmem>>) attributes {dimension_semantics = [#tpu.dimension_semantics<parallel>, #tpu.dimension_semantics<parallel>], iteration_bounds = array<i64: 2, 1>, scalar_prefetch = 0 : i64, scratch_operands = 0 : i64, tpu.core_type = #tpu.core_type<tc>, window_params = [{transform_indices = @transform_0, window_bounds = array<i64: 1, 16, 128>}, {transform_indices = @transform_1, window_bounds = array<i64: 1, 8, 16>}, {transform_indices = @transform_2, window_bounds = array<i64: 1, 32, 3>}, {transform_indices = @transform_3, window_bounds = array<i64: 1, 3, 128>}, {transform_indices = @transform_4, window_bounds = array<i64: 1, 8, 128>}, {transform_indices = @transform_5, window_bounds = array<i64: 1, 32, 128>}]} {
    %c0 = arith.constant 0 : index
    %c0_0 = arith.constant 0 : index
    %c0_1 = arith.constant 0 : index
    %0 = vector.load %arg3[%c0, %c0_0, %c0_1] : memref<1x8x16xf32, #tpu.memory_space<vmem>>, vector<1x8x16xf32>
    %c0_2 = arith.constant 0 : index
    %c0_3 = arith.constant 0 : index
    %c0_4 = arith.constant 0 : index
    %1 = vector.load %arg4[%c0_2, %c0_3, %c0_4] : memref<1x32x3xf32, #tpu.memory_space<vmem>>, vector<1x32x3xf32>
    %c0_5 = arith.constant 0 : index
    %c0_6 = arith.constant 0 : index
    %c0_7 = arith.constant 0 : index
    %2 = vector.load %arg2[%c0_5, %c0_6, %c0_7] : memref<1x16x128xf32, #tpu.memory_space<vmem>>, vector<1x16x128xf32>
    %cst = arith.constant dense<0xFF800000> : vector<1x128xf32>
    %3 = vector.multi_reduction <maximumf>, %2, %cst [1] : vector<1x16x128xf32> to vector<1x128xf32>
    %4 = vector.shape_cast %3 : vector<1x128xf32> to vector<1x1x128xf32>
    %5 = vector.broadcast %4 : vector<1x1x128xf32> to vector<1x16x128xf32>
    %6 = arith.subf %2, %5 : vector<1x16x128xf32>
    %7 = math.exp %6 : vector<1x16x128xf32>
    %cst_8 = arith.constant dense<0.000000e+00> : vector<1x128xf32>
    %8 = vector.multi_reduction <add>, %7, %cst_8 [1] : vector<1x16x128xf32> to vector<1x128xf32>
    %9 = vector.shape_cast %8 : vector<1x128xf32> to vector<1x1x128xf32>
    %10 = vector.broadcast %9 : vector<1x1x128xf32> to vector<1x16x128xf32>
    %11 = arith.divf %7, %10 : vector<1x16x128xf32>
    "tpu.trace_start"() <{level = 10 : i32, message = "btc,bcq->btq"}> : () -> ()
    %cst_9 = arith.constant dense<0.000000e+00> : vector<1x8x128xf32>
    %12 = tpu.matmul %0, %11, %cst_9 {dimension_numbers = #tpu.dot_dimension_numbers<[2], [1], [1], [2], [0, 0, 0, 1, 1, 2], [0], [0]>} : vector<1x8x16xf32>, vector<1x16x128xf32>, vector<1x8x128xf32> -> vector<1x8x128xf32>
    "tpu.trace_stop"() : () -> ()
    %c0_10 = arith.constant 0 : index
    %c0_11 = arith.constant 0 : index
    %c0_12 = arith.constant 0 : index
    %13 = vector.load %arg5[%c0_10, %c0_11, %c0_12] : memref<1x3x128xf32, #tpu.memory_space<vmem>>, vector<1x3x128xf32>
    %14 = vector.extract_strided_slice %1 {offsets = [0, 0, 0], sizes = [1, 32, 1], strides = [1, 1, 1]} : vector<1x32x3xf32> to vector<1x32x1xf32>
    %15 = vector.extract_strided_slice %13 {offsets = [0, 0, 0], sizes = [1, 1, 128], strides = [1, 1, 1]} : vector<1x3x128xf32> to vector<1x1x128xf32>
    %16 = vector.broadcast %14 : vector<1x32x1xf32> to vector<1x32x128xf32>
    %17 = vector.broadcast %15 : vector<1x1x128xf32> to vector<1x32x128xf32>
    %18 = arith.subf %16, %17 : vector<1x32x128xf32>
    %19 = math.absf %18 : vector<1x32x128xf32>
    %20 = vector.extract_strided_slice %1 {offsets = [0, 0, 1], sizes = [1, 32, 1], strides = [1, 1, 1]} : vector<1x32x3xf32> to vector<1x32x1xf32>
    %21 = vector.extract_strided_slice %13 {offsets = [0, 1, 0], sizes = [1, 1, 128], strides = [1, 1, 1]} : vector<1x3x128xf32> to vector<1x1x128xf32>
    %22 = vector.broadcast %20 : vector<1x32x1xf32> to vector<1x32x128xf32>
    %23 = vector.broadcast %21 : vector<1x1x128xf32> to vector<1x32x128xf32>
    %24 = arith.subf %22, %23 : vector<1x32x128xf32>
    %25 = math.absf %24 : vector<1x32x128xf32>
    %26 = arith.addf %19, %25 : vector<1x32x128xf32>
    %27 = vector.extract_strided_slice %1 {offsets = [0, 0, 2], sizes = [1, 32, 1], strides = [1, 1, 1]} : vector<1x32x3xf32> to vector<1x32x1xf32>
    %28 = vector.extract_strided_slice %13 {offsets = [0, 2, 0], sizes = [1, 1, 128], strides = [1, 1, 1]} : vector<1x3x128xf32> to vector<1x1x128xf32>
    %29 = vector.broadcast %27 : vector<1x32x1xf32> to vector<1x32x128xf32>
    %30 = vector.broadcast %28 : vector<1x1x128xf32> to vector<1x32x128xf32>
    %31 = arith.subf %29, %30 : vector<1x32x128xf32>
    %32 = math.absf %31 : vector<1x32x128xf32>
    %33 = arith.addf %26, %32 : vector<1x32x128xf32>
    %cst_13 = arith.constant 5.000000e-01 : f32
    %34 = vector.broadcast %cst_13 : f32 to vector<1x32x128xf32>
    %35 = arith.cmpf olt, %33, %34 : vector<1x32x128xf32>
    %36 = arith.extui %35 : vector<1x32x128xi1> to vector<1x32x128xi8>
    %c0_14 = arith.constant 0 : index
    %c0_15 = arith.constant 0 : index
    %c0_16 = arith.constant 0 : index
    %37 = vector.load %arg7[%c0_14, %c0_15, %c0_16] : memref<1x32x128xi8, #tpu.memory_space<vmem>>, vector<1x32x128xi8>
    tpu.vector_store %arg7[%c0_14, %c0_15, %c0_16], %36 {strides = array<i32>} : memref<1x32x128xi8, #tpu.memory_space<vmem>>, vector<1x32x128xi8>,
    %38 = vector.extract_strided_slice %33 {offsets = [0, 0, 0], sizes = [1, 8, 128], strides = [1, 1, 1]} : vector<1x32x128xf32> to vector<1x8x128xf32>
    %39 = arith.addf %38, %12 : vector<1x8x128xf32>
    %c0_17 = arith.constant 0 : index
    %c0_18 = arith.constant 0 : index
    %c0_19 = arith.constant 0 : index
    %40 = vector.load %arg6[%c0_17, %c0_18, %c0_19] : memref<1x8x128xf32, #tpu.memory_space<vmem>>, vector<1x8x128xf32>
    tpu.vector_store %arg6[%c0_17, %c0_18, %c0_19], %39 {strides = array<i32>} : memref<1x8x128xf32, #tpu.memory_space<vmem>>, vector<1x8x128xf32>,
    return
  }
  func.func @transform_0(%arg0: i32, %arg1: i32) -> (i32, i32, i32) {
    %c0_i32 = arith.constant 0 : i32
    %c0_i32_0 = arith.constant 0 : i32
    return %arg0, %c0_i32, %arg1 : i32, i32, i32
  }
  func.func @transform_1(%arg0: i32, %arg1: i32) -> (i32, i32, i32) {
    %c0_i32 = arith.constant 0 : i32
    %c0_i32_0 = arith.constant 0 : i32
    %c0_i32_1 = arith.constant 0 : i32
    return %arg0, %c0_i32, %c0_i32_0 : i32, i32, i32
  }
  func.func @transform_2(%arg0: i32, %arg1: i32) -> (i32, i32, i32) {
    %c0_i32 = arith.constant 0 : i32
    %c0_i32_0 = arith.constant 0 : i32
    %c0_i32_1 = arith.constant 0 : i32
    return %arg0, %c0_i32, %c0_i32_0 : i32, i32, i32
  }
  func.func @transform_3(%arg0: i32, %arg1: i32) -> (i32, i32, i32) {
    %c0_i32 = arith.constant 0 : i32
    %c0_i32_0 = arith.constant 0 : i32
    return %arg0, %c0_i32, %arg1 : i32, i32, i32
  }
  func.func @transform_4(%arg0: i32, %arg1: i32) -> (i32, i32, i32) {
    %c0_i32 = arith.constant 0 : i32
    %c0_i32_0 = arith.constant 0 : i32
    return %arg0, %c0_i32, %arg1 : i32, i32, i32
  }
  func.func @transform_5(%arg0: i32, %arg1: i32) -> (i32, i32, i32) {
    %c0_i32 = arith.constant 0 : i32
    %c0_i32_0 = arith.constant 0 : i32
    return %arg0, %c0_i32, %arg1 : i32, i32, i32
  }
}

</mosaic_0001>

<llo_original>
// kernel: _matcher_cost_device.1
$region0: #{_matcher_cost_device.1}
  #allocation0 [shape = 'u32[]', space=smem, size = 0x4, offset = 0x4, fixed_abs, tag = 'smem constant byte address 0x4 - core index']
  #allocation1 [shape = 'u32[144,128]{1,0:T(1,128)}', space=vmem, size = 0x12000, scoped, tag = 'internal scratch']
  %s0 = inlined_call_operand.vmem [shape: f32[2,16,128], index: 0, kind: input, shape index: {}]
  %s1 = inlined_call_operand.vmem [shape: f32[2,8,16], index: 1, kind: input, shape index: {}]
  %s2 = inlined_call_operand.vmem [shape: f32[2,32,3], index: 2, kind: input, shape index: {}]
  %s3 = inlined_call_operand.vmem [shape: f32[2,3,128], index: 3, kind: input, shape index: {}]
  %s4 = inlined_call_operand.vmem [shape: f32[2,8,128], index: 4, kind: output, shape index: {0}]
  %s5 = inlined_call_operand.vmem [shape: s8[2,32,128], index: 5, kind: output, shape index: {1}]
  %6 = xla_tuple %s4, %s5
  %s7 = sld [smem:[#allocation0]]
  $region57: #{_matcher_cost_device.1} parent=0
    _
  %s9 = ssub.s32 1, %s7
  %s10 = scalar_select 0, %s9, %s7
  loop: start=0, step=1, limit=4
  $region2: #{_matcher_cost_device.1} parent=0 // loop_pre_header
    _
  $region3: #{_matcher_cost_device.1} parent=0 // loop_header
    %s12 = sphi 0, %s16
    %p13 = scmp.ge.s32.totalorder %s12, 4
    %s19 = sphi 0, %s31
    %s20 = sphi 0, %s27
    %s21 = sphi 0, %s19
    %s22 = sphi 0, %s20
    %s23 = sphi 0, %s21
    %s24 = sphi 0, %s22
    %s36 = sphi 0, %s38
    %s39 = sphi 0, %s36
    %s40 = sphi 0, %s39
    %s56 = sphi 0, %s40
    %s62 = sphi 0, %s64
    %s65 = sphi 0, %s62
    %s66 = sphi 0, %s65
    %s82 = sphi 0, %s66
    %s88 = sphi 0, %s90
    %s91 = sphi 0, %s88
    %s92 = sphi 0, %s91
    %s108 = sphi 0, %s92
    %s116 = sphi 0, %s118
    %s119 = sphi 0, %s116
    %s120 = sphi 0, %s119
    %s136 = sphi 0, %s120
    %s144 = sphi 0, %s146
    %s147 = sphi 0, %s144
    %s148 = sphi 0, %s147
    %s164 = sphi 0, %s148
    %s172 = sphi 0, %s174
    %s175 = sphi 0, %s172
    %s176 = sphi 0, %s175
    %s192 = sphi 0, %s176
  $region4: #{_matcher_cost_device.1} parent=0 // loop_header_branch
    %15 = sbr.rel (%p13) target = $region8
  $region5: #{_matcher_cost_device.1} parent=0 // loop_body
    %s17 = ssub.s32 %s12, 1
    %s18 = ssub.s32 %s12, 2
    %s25 = sadd.s32 1, %s20
    %p26 = scmp.ge.s32.totalorder %s25, 1
    %s27 = scalar_select %p26, 0, %s25
    %s28 = sadd.s32 1, %s19
    %s29 = scalar_select %p26, %s28, %s19
    %p30 = scmp.ge.s32.totalorder %s29, 2
    %s31 = scalar_select %p30, 0, %s29
    %s32 = ssub.s32 %s19, %s31
    %s33 = ssub.s32 %s20, %s27
    %s34 = sor.u32 %s32, %s33
    %p35 = scmp.eq.s32.totalorder %s34, 0
    %s37 = sadd.s32 %s36, 1
    %s38 = scalar_select %p35, %s36, %s37
    %p41 = pneg %p35
    %p42 = scmp.eq.s32.totalorder %s12, 1
    %p43 = por %p41, %p42
    %p44 = scmp.ne.s32.totalorder %s36, %s39
    %p45 = scmp.eq.s32.totalorder %s12, 0
    %p46 = por %p44, %p45
    %p47 = scmp.ne.s32.totalorder %s36, %s39
    %p48 = scmp.eq.s32.totalorder %s17, 1
    %p49 = por %p47, %p48
    %p50 = scmp.ne.s32.totalorder %s39, %s40
    %p51 = scmp.eq.s32.totalorder %s17, 0
    %p52 = por %p50, %p51
    %p53 = scmp.ne.s32.totalorder %s39, %s40
    %p54 = scmp.eq.s32.totalorder %s18, 1
    %p55 = por %p53, %p54
    %p57 = scmp.ne.s32.totalorder %s40, %s56
    %p58 = scmp.eq.s32.totalorder %s18, 0
    %p59 = por %p57, %p58
    %s60 = ssub.s32 %s19, %s31
    %p61 = scmp.eq.s32.totalorder %s60, 0
    %s63 = sadd.s32 %s62, 1
    %s64 = scalar_select %p61, %s62, %s63
    %p67 = pneg %p61
    %p68 = scmp.eq.s32.totalorder %s12, 1
    %p69 = por %p67, %p68
    %p70 = scmp.ne.s32.totalorder %s62, %s65
    %p71 = scmp.eq.s32.totalorder %s12, 0
    %p72 = por %p70, %p71
    %p73 = scmp.ne.s32.totalorder %s62, %s65
    %p74 = scmp.eq.s32.totalorder %s17, 1
    %p75 = por %p73, %p74
    %p76 = scmp.ne.s32.totalorder %s65, %s66
    %p77 = scmp.eq.s32.totalorder %s17, 0
    %p78 = por %p76, %p77
    %p79 = scmp.ne.s32.totalorder %s65, %s66
    %p80 = scmp.eq.s32.totalorder %s18, 1
    %p81 = por %p79, %p80
    %p83 = scmp.ne.s32.totalorder %s66, %s82
    %p84 = scmp.eq.s32.totalorder %s18, 0
    %p85 = por %p83, %p84
    %s86 = ssub.s32 %s19, %s31
    %p87 = scmp.eq.s32.totalorder %s86, 0
    %s89 = sadd.s32 %s88, 1
    %s90 = scalar_select %p87, %s88, %s89
    %p93 = pneg %p87
    %p94 = scmp.eq.s32.totalorder %s12, 1
    %p95 = por %p93, %p94
    %p96 = scmp.ne.s32.totalorder %s88, %s91
    %p97 = scmp.eq.s32.totalorder %s12, 0
    %p98 = por %p96, %p97
    %p99 = scmp.ne.s32.totalorder %s88, %s91
    %p100 = scmp.eq.s32.totalorder %s17, 1
    %p101 = por %p99, %p100
    %p102 = scmp.ne.s32.totalorder %s91, %s92
    %p103 = scmp.eq.s32.totalorder %s17, 0
    %p104 = por %p102, %p103
    %p105 = scmp.ne.s32.totalorder %s91, %s92
    %p106 = scmp.eq.s32.totalorder %s18, 1
    %p107 = por %p105, %p106
    %p109 = scmp.ne.s32.totalorder %s92, %s108
    %p110 = scmp.eq.s32.totalorder %s18, 0
    %p111 = por %p109, %p110
    %s112 = ssub.s32 %s19, %s31
    %s113 = ssub.s32 %s20, %s27
    %s114 = sor.u32 %s112, %s113
    %p115 = scmp.eq.s32.totalorder %s114, 0
    %s117 = sadd.s32 %s116, 1
    %s118 = scalar_select %p115, %s116, %s117
    %p121 = pneg %p115
    %p122 = scmp.eq.s32.totalorder %s12, 1
    %p123 = por %p121, %p122
    %p124 = scmp.ne.s32.totalorder %s116, %s119
    %p125 = scmp.eq.s32.totalorder %s12, 0
    %p126 = por %p124, %p125
    %p127 = scmp.ne.s32.totalorder %s116, %s119
    %p128 = scmp.eq.s32.totalorder %s17, 1
    %p129 = por %p127, %p128
    %p130 = scmp.ne.s32.totalorder %s119, %s120
    %p131 = scmp.eq.s32.totalorder %s17, 0
    %p132 = por %p130, %p131
    %p133 = scmp.ne.s32.totalorder %s119, %s120
    %p134 = scmp.eq.s32.totalorder %s18, 1
    %p135 = por %p133, %p134
    %p137 = scmp.ne.s32.totalorder %s120, %s136
    %p138 = scmp.eq.s32.totalorder %s18, 0
    %p139 = por %p137, %p138
    %s140 = ssub.s32 %s19, %s31
    %s141 = ssub.s32 %s20, %s27
    %s142 = sor.u32 %s140, %s141
    %p143 = scmp.eq.s32.totalorder %s142, 0
    %s145 = sadd.s32 %s144, 1
    %s146 = scalar_select %p143, %s144, %s145
    %p149 = pneg %p143
    %p150 = scmp.eq.s32.totalorder %s12, 1
    %p151 = por %p149, %p150
    %p152 = scmp.ne.s32.totalorder %s144, %s147
    %p153 = scmp.eq.s32.totalorder %s12, 0
    %p154 = por %p152, %p153
    %p155 = scmp.ne.s32.totalorder %s144, %s147
    %p156 = scmp.eq.s32.totalorder %s17, 1
    %p157 = por %p155, %p156
    %p158 = scmp.ne.s32.totalorder %s147, %s148
    %p159 = scmp.eq.s32.totalorder %s17, 0
    %p160 = por %p158, %p159
    %p161 = scmp.ne.s32.totalorder %s147, %s148
    %p162 = scmp.eq.s32.totalorder %s18, 1
    %p163 = por %p161, %p162
    %p165 = scmp.ne.s32.totalorder %s148, %s164
    %p166 = scmp.eq.s32.totalorder %s18, 0
    %p167 = por %p165, %p166
    %s168 = ssub.s32 %s19, %s31
    %s169 = ssub.s32 %s20, %s27
    %s170 = sor.u32 %s168, %s169
    %p171 = scmp.eq.s32.totalorder %s170, 0
    %s173 = sadd.s32 %s172, 1
    %s174 = scalar_select %p171, %s172, %s173
    %p177 = pneg %p171
    %p178 = scmp.eq.s32.totalorder %s12, 1
    %p179 = por %p177, %p178
    %p180 = scmp.ne.s32.totalorder %s172, %s175
    %p181 = scmp.eq.s32.totalorder %s12, 0
    %p182 = por %p180, %p181
    %p183 = scmp.ne.s32.totalorder %s172, %s175
    %p184 = scmp.eq.s32.totalorder %s17, 1
    %p185 = por %p183, %p184
    %p186 = scmp.ne.s32.totalorder %s175, %s176
    %p187 = scmp.eq.s32.totalorder %s17, 0
    %p188 = por %p186, %p187
    %p189 = scmp.ne.s32.totalorder %s175, %s176
    %p190 = scmp.eq.s32.totalorder %s18, 1
    %p191 = por %p189, %p190
    %p193 = scmp.ne.s32.totalorder %s176, %s192
    %p194 = scmp.eq.s32.totalorder %s18, 0
    %p195 = por %p193, %p194
    %p196 = scmp.le.s32.totalorder 1, %s12
    %p197 = scmp.lt.s32.totalorder %s12, 3
    %p198 = pnand %p196, %p197
    %p199 = pneg %p198
    // Predicated region
    $region9: #{_matcher_cost_device.1} parent=5 // pred_check
      _
    $region10: #{_matcher_cost_device.1} parent=5 // pred_check_branch
      %201 = sbr.rel (%p198) target = $region12
    $region11: #{_matcher_cost_device.1} parent=5 // pred_region
      %s202 = ssub.s32 %s12, 1
    $region12: #{_matcher_cost_device.1} parent=5 // pred_fallthru
      _
    %p203 = scmp.lt.s32.totalorder %s12, 2
    // Predicated region
    $region13: #{_matcher_cost_device.1} parent=5 // pred_check
      %p204 = pneg %p203
    $region14: #{_matcher_cost_device.1} parent=5 // pred_check_branch
      %206 = sbr.rel (%p204) target = $region16
    $region15: #{_matcher_cost_device.1} parent=5 // pred_region
      // Predicated region
      $region17: #{_matcher_cost_device.1} parent=15 // pred_check
        %p207 = pneg %p46
      $region18: #{_matcher_cost_device.1} parent=15 // pred_check_branch
        %209 = sbr.rel (%p207) target = $region20
      $region19: #{_matcher_cost_device.1} parent=15 // pred_region
        %p210 = scmp.lt.s32.totalorder %s19, 1
        %s211 = scalar_select %p210, %s19, 1
        %p212 = scmp.lt.s32.totalorder %s20, 0
        %s213 = scalar_select %p212, %s20, 0
        %s214 = smul.addr %s211, 2
        %s215 = sadd.s32 %s213, %s214
        %s216 = smul.addr %s215, 8
        %s217 = scalar_lea.vmem %s0, %s216
      $region20: #{_matcher_cost_device.1} parent=15 // pred_fallthru
        _
      // Predicated region
      $region21: #{_matcher_cost_device.1} parent=15 // pred_check
        %p218 = pneg %p72
      $region22: #{_matcher_cost_device.1} parent=15 // pred_check_branch
        %220 = sbr.rel (%p218) target = $region24
      $region23: #{_matcher_cost_device.1} parent=15 // pred_region
        %p221 = scmp.lt.s32.totalorder %s19, 1
        %s222 = scalar_select %p221, %s19, 1
        %s223 = smul.addr %s222, 8
        %s224 = scalar_lea.vmem %s1, %s223
      $region24: #{_matcher_cost_device.1} parent=15 // pred_fallthru
        _
      // Predicated region
      $region25: #{_matcher_cost_device.1} parent=15 // pred_check
        %p225 = pneg %p98
      $region26: #{_matcher_cost_device.1} parent=15 // pred_check_branch
        %227 = sbr.rel (%p225) target = $region28
      $region27: #{_matcher_cost_device.1} parent=15 // pred_region
        %p228 = scmp.lt.s32.totalorder %s19, 1
        %s229 = scalar_select %p228, %s19, 1
        %s230 = smul.addr %s229, 4
        %s231 = smul.addr %s230, 8
        %s232 = scalar_lea.vmem %s2, %s231
      $region28: #{_matcher_cost_device.1} parent=15 // pred_fallthru
        _
      // Predicated region
      $region29: #{_matcher_cost_device.1} parent=15 // pred_check
        %p233 = pneg %p126
      $region30: #{_matcher_cost_device.1} parent=15 // pred_check_branch
        %235 = sbr.rel (%p233) target = $region32
      $region31: #{_matcher_cost_device.1} parent=15 // pred_region
        %p236 = scmp.lt.s32.totalorder %s19, 1
        %s237 = scalar_select %p236, %s19, 1
        %p238 = scmp.lt.s32.totalorder %s20, 0
        %s239 = scalar_select %p238, %s20, 0
        %s240 = sadd.s32 %s239, %s237
        %s241 = smul.addr %s240, 4
        %s242 = scalar_lea.vmem %s3, %s241
      $region32: #{_matcher_cost_device.1} parent=15 // pred_fallthru
        _
    $region16: #{_matcher_cost_device.1} parent=5 // pred_fallthru
      _
    %p243 = scmp.le.s32.totalorder 1, %s12
    %p244 = scmp.lt.s32.totalorder %s12, 3
    %p245 = pnand %p243, %p244
    %p246 = pneg %p245
    // Predicated region
    $region33: #{_matcher_cost_device.1} parent=5 // pred_check
      _
    $region34: #{_matcher_cost_device.1} parent=5 // pred_check_branch
      %248 = sbr.rel (%p245) target = $region36
    $region35: #{_matcher_cost_device.1} parent=5 // pred_region
      %s249 = ssub.s32 %s12, 1
      %p250 = scmp.lt.s32.totalorder %s21, 1
      %s251 = scalar_select %p250, %s21, 1
      %p252 = scmp.lt.s32.totalorder %s22, 0
      %s253 = scalar_select %p252, %s22, 0
      %s254 = smul.addr %s251, 2
      %s255 = sadd.s32 %s253, %s254
      %s256 = smul.addr %s255, 8
      %s257 = scalar_lea.vmem %s0, %s256
      %p258 = pneg %p52
      %p259 = pneg %p49
      %p260 = scmp.lt.s32.totalorder %s21, 1
      %s261 = scalar_select %p260, %s21, 1
      %s262 = smul.addr %s261, 8
      %s263 = scalar_lea.vmem %s1, %s262
      %p264 = pneg %p78
      %p265 = pneg %p75
      %p266 = scmp.lt.s32.totalorder %s21, 1
      %s267 = scalar_select %p266, %s21, 1
      %s268 = smul.addr %s267, 4
      %s269 = smul.addr %s268, 8
      %s270 = scalar_lea.vmem %s2, %s269
      %p271 = pneg %p104
      %p272 = pneg %p101
      %p273 = scmp.lt.s32.totalorder %s21, 1
      %s274 = scalar_select %p273, %s21, 1
      %p275 = scmp.lt.s32.totalorder %s22, 0
      %s276 = scalar_select %p275, %s22, 0
      %s277 = sadd.s32 %s276, %s274
      %s278 = smul.addr %s277, 4
      %s279 = scalar_lea.vmem %s3, %s278
      %p280 = pneg %p132
      %p281 = pneg %p129
      %p282 = pneg %p160
      %p283 = pneg %p157
      %p284 = scmp.lt.s32.totalorder %s21, 1
      %s285 = scalar_select %p284, %s21, 1
      %p286 = scmp.lt.s32.totalorder %s22, 0
      %s287 = scalar_select %p286, %s22, 0
      %s288 = sadd.s32 %s287, %s285
      %s289 = smul.addr %s288, 8
      %s290 = scalar_lea.vmem %s4, %s289
      %p291 = pneg %p188
      %p292 = pneg %p185
      %p293 = scmp.lt.s32.totalorder %s21, 1
      %s294 = scalar_select %p293, %s21, 1
      %p295 = scmp.lt.s32.totalorder %s22, 0
      %s296 = scalar_select %p295, %s22, 0
      %s297 = smul.addr %s294, 4
      %s298 = sadd.s32 %s296, %s297
      %s299 = smul.addr %s298, 2
      %s300 = scalar_lea.vmem %s5, %s299
      %p301 = scmp.lt.s32.totalorder %s21, 1
      %s302 = scalar_select %p301, %s21, 1
      %p303 = scmp.lt.s32.totalorder %s22, 0
      %s304 = scalar_select %p303, %s22, 0
      %s305 = smul.addr %s302, 2
      %s306 = sadd.s32 %s304, %s305
      %s307 = smul.addr %s306, 8
      %s308 = scalar_lea.vmem %s0, %s307
      %p309 = scmp.lt.s32.totalorder %s21, 1
      %s310 = scalar_select %p309, %s21, 1
      %s311 = smul.addr %s310, 8
      %s312 = scalar_lea.vmem %s1, %s311
      %p313 = scmp.lt.s32.totalorder %s21, 1
      %s314 = scalar_select %p313, %s21, 1
      %s315 = smul.addr %s314, 4
      %s316 = smul.addr %s315, 8
      %s317 = scalar_lea.vmem %s2, %s316
      %p318 = scmp.lt.s32.totalorder %s21, 1
      %s319 = scalar_select %p318, %s21, 1
      %p320 = scmp.lt.s32.totalorder %s22, 0
      %s321 = scalar_select %p320, %s22, 0
      %s322 = sadd.s32 %s321, %s319
      %s323 = smul.addr %s322, 4
      %s324 = scalar_lea.vmem %s3, %s323
      %p325 = scmp.lt.s32.totalorder %s21, 1
      %s326 = scalar_select %p325, %s21, 1
      %p327 = scmp.lt.s32.totalorder %s22, 0
      %s328 = scalar_select %p327, %s22, 0
      %s329 = sadd.s32 %s328, %s326
      %s330 = smul.addr %s329, 8
      %s331 = scalar_lea.vmem %s4, %s330
      %p332 = scmp.lt.s32.totalorder %s21, 1
      %s333 = scalar_select %p332, %s21, 1
      %p334 = scmp.lt.s32.totalorder %s22, 0
      %s335 = scalar_select %p334, %s22, 0
      %s336 = smul.addr %s333, 4
      %s337 = sadd.s32 %s335, %s336
      %s338 = smul.addr %s337, 2
      %s339 = scalar_lea.vmem %s5, %s338
      %v342 = vld [vmem:[%s312] sm:$0xff]
      %v343 = vld [vmem:[%s317] sm:$0xff]
      %v344 = vld [vmem:[%s317 + $0x8] sm:$0xff]
      %v345 = vld [vmem:[%s317 + $0x10] sm:$0xff]
      %v346 = vld [vmem:[%s317 + $0x18] sm:$0xff]
      %v347 = vld [vmem:[%s308] sm:$0xff]
      %v348 = vld [vmem:[%s308 + $0x8] sm:$0xff]
      %v349 = vmax.f32 %v347, %v348
      %v350 = vrot.slane %v349, 4
      %v351 = vmax.f32 %v349, %v350
      %v352 = vrot.slane %v351, 2
      %v353 = vmax.f32 %v351, %v352
      %v354 = vrot.slane %v353, 1
      %v355 = vmax.f32 %v353, %v354
      %v356 = vsub.f32 %v347, %v355
      %v357 = vsub.f32 %v348, %v355
      %v358 = vmul.f32 %v356, 1.442695
      %v359 = vpow.pop %v358
      %v360 = vmul.f32 %v357, 1.442695
      %v361 = vpow.pop %v360
      %v362 = vadd.f32 %v359, %v361
      %v363 = vrot.slane %v362, 4
      %v364 = vadd.f32 %v362, %v363
      %v365 = vrot.slane %v364, 2
      %v366 = vadd.f32 %v364, %v365
      %v367 = vrot.slane %v366, 1
      %v368 = vadd.f32 %v366, %v367
      %v369 = vrcp.pop %v368
      %v370 = vmul.f32 %v359, %v369
      %v371 = vmul.f32 %v361, %v369
      %vm372 = vcmask 130048
      %v374 = vsel %vm372, %v342, 0
      %376 = vmatprep.subr.mxu0 0.0
      %377 = vmatpush1.msra.mxu0 %v370
      %378 = vmatprep.subr.mxu0 0.0
      %379 = vmatpush1.msra.mxu0 %v371
      %380 = vmatprep.subr.mxu0 0.0
      %381 = vmatpush1.msra.mxu0 0.0
      %382 = vmatprep.subr.mxu0 0.0
      %383 = vmatpush1.msra.mxu0 0.0
      %384 = vmatprep.subr.mxu0 0.0
      %385 = vmatpush1.msra.mxu0 0.0
      %386 = vmatprep.subr.mxu0 0.0
      %387 = vmatpush1.msra.mxu0 0.0
      %388 = vmatprep.subr.mxu0 0.0
      %389 = vmatpush1.msra.mxu0 0.0
      %390 = vmatprep.subr.mxu0 0.0
      %391 = vmatpush1.msra.mxu0 0.0
      %392 = vmatprep.subr.mxu0 0.0
      %393 = vmatpush1.msra.mxu0 0.0
      %394 = vmatprep.subr.mxu0 0.0
      %395 = vmatpush1.msra.mxu0 0.0
      %396 = vmatprep.subr.mxu0 0.0
      %397 = vmatpush1.msra.mxu0 0.0
      %398 = vmatprep.subr.mxu0 0.0
      %399 = vmatpush1.msra.mxu0 0.0
      %400 = vmatprep.subr.mxu0 0.0
      %401 = vmatpush1.msra.mxu0 0.0
      %402 = vmatprep.subr.mxu0 0.0
      %403 = vmatpush1.msra.mxu0 0.0
      %404 = vmatprep.subr.mxu0 0.0
      %405 = vmatpush1.msra.mxu0 0.0
      %406 = vmatprep.subr.mxu0 0.0
      %407 = vmatpush1.msra.mxu0 0.0
      %408 = vmatprep.subr.mxu0 0.0
      %409 = vmatpush1.msra.mxu0 0.0
      %410 = vmatprep.subr.mxu0 0.0
      %411 = vmatpush1.msra.mxu0 0.0
      %412 = vmatprep.subr.mxu0 0.0
      %413 = vmatpush1.msra.mxu0 0.0
      %414 = vmatprep.subr.mxu0 0.0
      %415 = vmatpush1.msra.mxu0 0.0
      %416 = vmatprep.subr.mxu0 0.0
      %417 = vmatpush1.msra.mxu0 0.0
      %418 = vmatprep.subr.mxu0 0.0
      %419 = vmatpush1.msra.mxu0 0.0
      %420 = vmatprep.subr.mxu0 0.0
      %421 = vmatpush1.msra.mxu0 0.0
      %422 = vmatprep.subr.mxu0 0.0
      %423 = vmatpush1.msra.mxu0 0.0
      %424 = vmatprep.subr.mxu0 0.0
      %425 = vmatpush1.msra.mxu0 0.0
      %426 = vmatprep.subr.mxu0 0.0
      %427 = vmatpush1.msra.mxu0 0.0
      %428 = vmatprep.subr.mxu0 0.0
      %429 = vmatpush1.msra.mxu0 0.0
      %430 = vmatprep.subr.mxu0 0.0
      %431 = vmatpush1.msra.mxu0 0.0
      %432 = vmatprep.subr.mxu0 0.0
      %433 = vmatpush1.msra.mxu0 0.0
      %434 = vmatprep.subr.mxu0 0.0
      %435 = vmatpush1.msra.mxu0 0.0
      %436 = vmatprep.subr.mxu0 0.0
      %437 = vmatpush1.msra.mxu0 0.0
      %438 = vmatprep.subr.mxu0 0.0
      %439 = vmatpush1.msra.mxu0 0.0
      %440 = vmatprep.mubr.f32.mxu0 0.0
      %441 = vmatmul.mubr.f32.gmra.mrb[0].mxu0 %v374
      %v442 = vpop.f32.mrb[0].mxu0
      %v443 = vadd.f32 0.0, %v442
      %v444 = vpop.f32.mrb[0].mxu0
      %445 = vdwg.mxu0
      %v446 = vld [vmem:[%s324] sm:$0x7]
      %448 = vset.pattern.permute.xlu0 0
      %449 = vperm.xlu0 %448, %v343
      %v450 = vpop.permute.xlu0 %449
      %453 = vset.pattern.permute.xlu0 0
      %454 = vperm.xlu0 %453, %v344
      %v455 = vpop.permute.xlu0 %454
      %458 = vset.pattern.permute.xlu0 0
      %459 = vperm.xlu0 %458, %v345
      %v460 = vpop.permute.xlu0 %459
      %463 = vset.pattern.permute.xlu0 0
      %464 = vperm.xlu0 %463, %v346
      %v465 = vpop.permute.xlu0 %464
      %v467 = vlaneseq
      %v468 = vshrl.u32 %v467, 7
      %v469 = vsub.s32 0, %v468
      %v470 = vrot.slane %v446, %v469
      %v471 = vsub.f32 %v450, %v470
      %v472 = vsub.f32 %v455, %v470
      %v473 = vsub.f32 %v460, %v470
      %v474 = vsub.f32 %v465, %v470
      %v475 = vand.u32 2147483647, %v471
      %v476 = vand.u32 2147483647, %v472
      %v477 = vand.u32 2147483647, %v473
      %v478 = vand.u32 2147483647, %v474
      %479 = vset.pattern.permute.xlu0 1
      %480 = vperm.xlu0 %479, %v343
      %v481 = vpop.permute.xlu0 %480
      %483 = vset.pattern.permute.xlu0 1
      %484 = vperm.xlu0 %483, %v344
      %v485 = vpop.permute.xlu0 %484
      %487 = vset.pattern.permute.xlu0 1
      %488 = vperm.xlu0 %487, %v345
      %v489 = vpop.permute.xlu0 %488
      %491 = vset.pattern.permute.xlu0 1
      %492 = vperm.xlu0 %491, %v346
      %v493 = vpop.permute.xlu0 %492
      %v495 = vlaneseq
      %v496 = vshrl.u32 %v495, 7
      %v497 = vsub.s32 1, %v496
      %v498 = vrot.slane %v446, %v497
      %v499 = vsub.f32 %v481, %v498
      %v500 = vsub.f32 %v485, %v498
      %v501 = vsub.f32 %v489, %v498
      %v502 = vsub.f32 %v493, %v498
      %v503 = vand.u32 2147483647, %v499
      %v504 = vand.u32 2147483647, %v500
      %v505 = vand.u32 2147483647, %v501
      %v506 = vand.u32 2147483647, %v502
      %v507 = vadd.f32 %v475, %v503
      %v508 = vadd.f32 %v476, %v504
      %v509 = vadd.f32 %v477, %v505
      %v510 = vadd.f32 %v478, %v506
      %511 = vset.pattern.permute.xlu0 2
      %512 = vperm.xlu0 %511, %v343
      %v513 = vpop.permute.xlu0 %512
      %515 = vset.pattern.permute.xlu0 2
      %516 = vperm.xlu0 %515, %v344
      %v517 = vpop.permute.xlu0 %516
      %519 = vset.pattern.permute.xlu0 2
      %520 = vperm.xlu0 %519, %v345
      %v521 = vpop.permute.xlu0 %520
      %523 = vset.pattern.permute.xlu0 2
      %524 = vperm.xlu0 %523, %v346
      %v525 = vpop.permute.xlu0 %524
      %v527 = vlaneseq
      %v528 = vshrl.u32 %v527, 7
      %v529 = vsub.s32 2, %v528
      %v530 = vrot.slane %v446, %v529
      %v531 = vsub.f32 %v513, %v530
      %v532 = vsub.f32 %v517, %v530
      %v533 = vsub.f32 %v521, %v530
      %v534 = vsub.f32 %v525, %v530
      %v535 = vand.u32 2147483647, %v531
      %v536 = vand.u32 2147483647, %v532
      %v537 = vand.u32 2147483647, %v533
      %v538 = vand.u32 2147483647, %v534
      %v539 = vadd.f32 %v507, %v535
      %v540 = vadd.f32 %v508, %v536
      %v541 = vadd.f32 %v509, %v537
      %v542 = vadd.f32 %v510, %v538
      %vm543 = vcmp.lt.f32.partialorder %v539, 0.5
      %vm544 = vcmp.lt.f32.partialorder %v540, 0.5
      %vm545 = vcmp.lt.f32.partialorder %v541, 0.5
      %vm546 = vcmp.lt.f32.partialorder %v542, 0.5
      %vm547 = vmpackc.low %vm544, %vm543
      %vm548 = vmpackc.low %vm546, %vm545
      %vm549 = vmpackc.even %vm548, %vm547
      %v550 = vsel %vm549, 16843009, 0
      %v551 = vunpack.c.0.s8 %v550
      %v552 = vunpack.c.1.s8 %v550
      %v553 = vunpack.c.2.s8 %v550
      %v554 = vunpack.c.3.s8 %v550
      %v555 = vpack.c.b16 %v551, %v551
      %v556 = vpack.c.b8 %v555, %v555
      %v557 = vpack.c.b16 %v552, %v552
      %v558 = vpack.c.b8 %v557, %v557
      %v559 = vpack.c.b16 %v553, %v553
      %v560 = vpack.c.b8 %v559, %v559
      %v561 = vpack.c.b16 %v554, %v554
      %v562 = vpack.c.b8 %v561, %v561
      %563 = vst [vmem:[%s339] sm:$0x3] %v556
      %564 = vst [vmem:[%s339 + $0x2] sm:$0x3] %v558
      %565 = vst [vmem:[%s339 + $0x4] sm:$0x3] %v560
      %566 = vst [vmem:[%s339 + $0x6] sm:$0x3] %v562
      %v567 = vadd.f32 %v539, %v443
      %568 = vst [vmem:[%s331] sm:$0xff] %v567
      %p569 = scmp.lt.s32.totalorder %s21, 1
      %s570 = scalar_select %p569, %s21, 1
      %p571 = scmp.lt.s32.totalorder %s22, 0
      %s572 = scalar_select %p571, %s22, 0
      %s573 = sadd.s32 %s572, %s570
      %s574 = smul.addr %s573, 8
      %s575 = scalar_lea.vmem %s4, %s574
      %p576 = scmp.lt.s32.totalorder %s21, 1
      %s577 = scalar_select %p576, %s21, 1
      %p578 = scmp.lt.s32.totalorder %s22, 0
      %s579 = scalar_select %p578, %s22, 0
      %s580 = smul.addr %s577, 4
      %s581 = sadd.s32 %s579, %s580
      %s582 = smul.addr %s581, 2
      %s583 = scalar_lea.vmem %s5, %s582
      // Predicated region
      $region37: #{_matcher_cost_device.1} parent=35 // pred_check
        %p584 = pneg %p157
      $region38: #{_matcher_cost_device.1} parent=35 // pred_check_branch
        %586 = sbr.rel (%p584) target = $region40
      $region39: #{_matcher_cost_device.1} parent=35 // pred_region
        _
      $region40: #{_matcher_cost_device.1} parent=35 // pred_fallthru
        _
      // Predicated region
      $region41: #{_matcher_cost_device.1} parent=35 // pred_check
        %p587 = pneg %p185
      $region42: #{_matcher_cost_device.1} parent=35 // pred_check_branch
        %589 = sbr.rel (%p587) target = $region44
      $region43: #{_matcher_cost_device.1} parent=35 // pred_region
        _
      $region44: #{_matcher_cost_device.1} parent=35 // pred_fallthru
        _
    $region36: #{_matcher_cost_device.1} parent=5 // pred_fallthru
      _
    %p590 = scmp.le.s32.totalorder 2, %s12
    // Predicated region
    $region45: #{_matcher_cost_device.1} parent=5 // pred_check
      %p591 = pneg %p590
    $region46: #{_matcher_cost_device.1} parent=5 // pred_check_branch
      %593 = sbr.rel (%p591) target = $region48
    $region47: #{_matcher_cost_device.1} parent=5 // pred_region
      %s594 = ssub.s32 %s12, 2
      // Predicated region
      $region49: #{_matcher_cost_device.1} parent=47 // pred_check
        %p595 = pneg %p163
      $region50: #{_matcher_cost_device.1} parent=47 // pred_check_branch
        %597 = sbr.rel (%p595) target = $region52
      $region51: #{_matcher_cost_device.1} parent=47 // pred_region
        %p598 = scmp.lt.s32.totalorder %s23, 1
        %s599 = scalar_select %p598, %s23, 1
        %p600 = scmp.lt.s32.totalorder %s24, 0
        %s601 = scalar_select %p600, %s24, 0
        %s602 = sadd.s32 %s601, %s599
        %s603 = smul.addr %s602, 8
        %s604 = scalar_lea.vmem %s4, %s603
      $region52: #{_matcher_cost_device.1} parent=47 // pred_fallthru
        _
      // Predicated region
      $region53: #{_matcher_cost_device.1} parent=47 // pred_check
        %p605 = pneg %p191
      $region54: #{_matcher_cost_device.1} parent=47 // pred_check_branch
        %607 = sbr.rel (%p605) target = $region56
      $region55: #{_matcher_cost_device.1} parent=47 // pred_region
        %p608 = scmp.lt.s32.totalorder %s23, 1
        %s609 = scalar_select %p608, %s23, 1
        %p610 = scmp.lt.s32.totalorder %s24, 0
        %s611 = scalar_select %p610, %s24, 0
        %s612 = smul.addr %s609, 4
        %s613 = sadd.s32 %s611, %s612
        %s614 = smul.addr %s613, 2
        %s615 = scalar_lea.vmem %s5, %s614
      $region56: #{_matcher_cost_device.1} parent=47 // pred_fallthru
        _
    $region48: #{_matcher_cost_device.1} parent=5 // pred_fallthru
      _
  $region6: #{_matcher_cost_device.1} parent=0 // loop_footer
    %s16 = sadd.s32 1, %s12
  $region7: #{_matcher_cost_device.1} parent=0 // loop_footer_branch
    %11 = sbr.rel target = $region3
  $region8: #{_matcher_cost_device.1} parent=0 // loop_exit
    _

</llo_original>
